<compile_context>
chip_gen: v7x
topology: tpu7x:2x2x1
jax: 0.10.0
libtpu: 0.0.40
codegen_flags: <defaults>
</compile_context>

<pallas_src>
import numpy as np
import jax
import jax.numpy as jnp
from jax.experimental import pallas as pl
from jax.experimental.pallas import tpu as pltpu


def _cross_stitch_kernel(w_ref, xa_ref, xb_ref, oa_ref, ob_ref):
    # w_ref : VMEM (Rb, 4) f32 per-row weights [w00, w01, w10, w11]
    # xa/xb : VMEM (Rb, Lb) input tiles (native dtype)
    # oa/ob : VMEM (Rb, Lb) output tiles
    w = w_ref[...]
    xa = xa_ref[...].astype(jnp.float32)   # widen in-register only (v5e-safe)
    xb = xb_ref[...].astype(jnp.float32)
    oa_ref[...] = (w[:, 0:1] * xa + w[:, 1:2] * xb).astype(oa_ref.dtype)
    ob_ref[...] = (w[:, 2:3] * xa + w[:, 3:4] * xb).astype(ob_ref.dtype)


def cross_stitch_pallas(x_a, x_b, weights, out_dtype=jnp.float32):
    """x_a, x_b: (N, C, H, W); weights: (C, 2, 2). Returns (out_a, out_b) NCHW.

    out_dtype defaults to float32 (matches the PyTorch module). Pass the
    activation dtype (e.g. bf16) to cut output HBM traffic when the consumer
    tolerates it.
    """
    assert x_a.shape == x_b.shape, (
        f"tensor shape a ({x_a.shape}) and b ({x_b.shape}) doesn't match"
    )
    N, C, H, W = x_a.shape
    HW = H * W
    R = N * C

    # Free, contiguous reshapes — no HBM copies.
    xa = x_a.reshape(R, HW)
    xb = x_b.reshape(R, HW)

    # Tiny per-row weight table: row r of the flat layout is channel r % C.
    w_rows = jnp.broadcast_to(
        weights.reshape(C, 4).astype(jnp.float32)[None, :, :], (N, C, 4)
    ).reshape(R, 4)

    # --- Tile selection (fixed targets + cdiv grid, ragged edges masked) ---
    # Rows: 256 is a multiple of 8/16/32 so f32/bf16/int8 packed-row layouts
    # stay unmasked; if R is smaller, the full extent is always legal.
    Rb = 256 if R > 256 else R
    # Lanes: prefer the full spatial row when it fits (single contiguous HBM
    # run per row, fewest grid steps); otherwise 2048-wide lane-dense tiles.
    Lb = HW if HW <= 4096 else 2048
    grid = (pl.cdiv(R, Rb), pl.cdiv(HW, Lb))

    data_spec = pl.BlockSpec((Rb, Lb), lambda i, j: (i, j))
    # Weight block index constant across the inner (j) axis -> re-DMA elided.
    w_spec = pl.BlockSpec((Rb, 4), lambda i, j: (i, 0))

    # --- VMEM budget from the real double-buffered footprint (+ headroom) ---
    in_itemsize = jnp.dtype(x_a.dtype).itemsize
    out_itemsize = jnp.dtype(out_dtype).itemsize
    in_tile_b = Rb * Lb * in_itemsize
    out_tile_b = Rb * Lb * out_itemsize
    w_tile_b = Rb * 4 * 4
    footprint = 2 * (2 * in_tile_b + 2 * out_tile_b + w_tile_b)  # double-buffered
    vmem_limit = int(footprint * 1.25) + (2 << 20)
    vmem_limit = max(16 * 1024 * 1024, min(vmem_limit, 48 * 1024 * 1024))

    in_bytes = 2 * R * HW * in_itemsize
    out_bytes = 2 * R * HW * out_itemsize
    cost = pl.CostEstimate(
        flops=6 * R * HW,                 # 2 mul + 1 add per element, 2 outputs
        transcendentals=0,
        bytes_accessed=in_bytes + out_bytes,
    )

    out_a, out_b = pl.pallas_call(
        _cross_stitch_kernel,
        grid=grid,
        in_specs=[w_spec, data_spec, data_spec],
        out_specs=[data_spec, data_spec],
        out_shape=[
            jax.ShapeDtypeStruct((R, HW), out_dtype),
            jax.ShapeDtypeStruct((R, HW), out_dtype),
        ],
        compiler_params=pltpu.CompilerParams(
            dimension_semantics=("parallel", "parallel"),
            vmem_limit_bytes=vmem_limit,
        ),
        cost_estimate=cost,
    )(w_rows, xa, xb)

    return out_a.reshape(N, C, H, W), out_b.reshape(N, C, H, W)


def make_cross_stitch_weights(channels, p_same, p_diff):
    """Deterministic parameter init, mirrors the module __init__."""
    weight_cs = np.array([[p_same, p_diff], [p_diff, p_same]], dtype=np.float32)
    weights = np.repeat(weight_cs[np.newaxis, :, :], channels, axis=0)  # (C, 2, 2)
    return jnp.asarray(weights)


if __name__ == "__main__":
    # Small shapes consistent with the forward: NCHW
    N, C, H, W = 2, 4, 16, 16
    p_same, p_diff = 0.9, 0.1

    key = jax.random.PRNGKey(0)
    ka, kb = jax.random.split(key)
    x_a = jax.random.normal(ka, (N, C, H, W), dtype=jnp.float32)
    x_b = jax.random.normal(kb, (N, C, H, W), dtype=jnp.float32)

    weights = make_cross_stitch_weights(C, p_same, p_diff)  # (C, 2, 2)

    out_a, out_b = cross_stitch_pallas(x_a, x_b, weights)
    jax.block_until_ready((out_a, out_b))

    # Pure-JAX reference of the PyTorch forward
    w00 = weights[:, 0, 0][None, :, None, None]
    w01 = weights[:, 0, 1][None, :, None, None]
    w10 = weights[:, 1, 0][None, :, None, None]
    w11 = weights[:, 1, 1][None, :, None, None]
    ref_a = w00 * x_a + w01 * x_b
    ref_b = w10 * x_a + w11 * x_b

    assert out_a.shape == (N, C, H, W) and out_a.dtype == jnp.float32
    assert out_b.shape == (N, C, H, W) and out_b.dtype == jnp.float32
    np.testing.assert_allclose(np.asarray(out_a), np.asarray(ref_a), rtol=1e-6, atol=1e-6)
    np.testing.assert_allclose(np.asarray(out_b), np.asarray(ref_b), rtol=1e-6, atol=1e-6)

    # Also exercise a ragged / bf16-output path to cover the cdiv tiling.
    xh_a = x_a.astype(jnp.bfloat16)
    xh_b = x_b.astype(jnp.bfloat16)
    oh_a, oh_b = cross_stitch_pallas(xh_a, xh_b, weights, out_dtype=jnp.bfloat16)
    jax.block_until_ready((oh_a, oh_b))
    assert oh_a.dtype == jnp.bfloat16 and oh_a.shape == (N, C, H, W)
    np.testing.assert_allclose(
        np.asarray(oh_a, dtype=np.float32), np.asarray(ref_a), rtol=2e-2, atol=2e-2
    )

    print("KERNEL_OK")
</pallas_src>

<mosaic_0001>
module attributes {stable_mosaic.version = 11 : i64} {
  func.func @_cross_stitch_kernel(%arg0: i32, %arg1: i32, %arg2: memref<8x4xf32, #tpu.memory_space<vmem>>, %arg3: memref<8x256xf32, #tpu.memory_space<vmem>>, %arg4: memref<8x256xf32, #tpu.memory_space<vmem>>, %arg5: memref<8x256xf32, #tpu.memory_space<vmem>>, %arg6: memref<8x256xf32, #tpu.memory_space<vmem>>) attributes {dimension_semantics = [#tpu.dimension_semantics<parallel>, #tpu.dimension_semantics<parallel>], iteration_bounds = array<i64: 1, 1>, scalar_prefetch = 0 : i64, scratch_operands = 0 : i64, tpu.core_type = #tpu.core_type<tc>, window_params = [{transform_indices = @transform_0, window_bounds = array<i64: 8, 4>}, {transform_indices = @transform_1, window_bounds = array<i64: 8, 256>}, {transform_indices = @transform_2, window_bounds = array<i64: 8, 256>}, {transform_indices = @transform_3, window_bounds = array<i64: 8, 256>}, {transform_indices = @transform_4, window_bounds = array<i64: 8, 256>}]} {
    %c0 = arith.constant 0 : index
    %c0_0 = arith.constant 0 : index
    %0 = vector.load %arg2[%c0, %c0_0] : memref<8x4xf32, #tpu.memory_space<vmem>>, vector<8x4xf32>
    %c0_1 = arith.constant 0 : index
    %c0_2 = arith.constant 0 : index
    %1 = vector.load %arg3[%c0_1, %c0_2] : memref<8x256xf32, #tpu.memory_space<vmem>>, vector<8x256xf32>
    %c0_3 = arith.constant 0 : index
    %c0_4 = arith.constant 0 : index
    %2 = vector.load %arg4[%c0_3, %c0_4] : memref<8x256xf32, #tpu.memory_space<vmem>>, vector<8x256xf32>
    %3 = vector.extract_strided_slice %0 {offsets = [0, 0], sizes = [8, 1], strides = [1, 1]} : vector<8x4xf32> to vector<8x1xf32>
    %4 = vector.broadcast %3 : vector<8x1xf32> to vector<8x256xf32>
    %5 = arith.mulf %4, %1 : vector<8x256xf32>
    %6 = vector.extract_strided_slice %0 {offsets = [0, 1], sizes = [8, 1], strides = [1, 1]} : vector<8x4xf32> to vector<8x1xf32>
    %7 = vector.broadcast %6 : vector<8x1xf32> to vector<8x256xf32>
    %8 = arith.mulf %7, %2 : vector<8x256xf32>
    %9 = arith.addf %5, %8 : vector<8x256xf32>
    %c0_5 = arith.constant 0 : index
    %c0_6 = arith.constant 0 : index
    %10 = vector.load %arg5[%c0_5, %c0_6] : memref<8x256xf32, #tpu.memory_space<vmem>>, vector<8x256xf32>
    tpu.vector_store %arg5[%c0_5, %c0_6], %9 {strides = array<i32>} : memref<8x256xf32, #tpu.memory_space<vmem>>, vector<8x256xf32>,
    %11 = vector.extract_strided_slice %0 {offsets = [0, 2], sizes = [8, 1], strides = [1, 1]} : vector<8x4xf32> to vector<8x1xf32>
    %12 = vector.broadcast %11 : vector<8x1xf32> to vector<8x256xf32>
    %13 = arith.mulf %12, %1 : vector<8x256xf32>
    %14 = vector.extract_strided_slice %0 {offsets = [0, 3], sizes = [8, 1], strides = [1, 1]} : vector<8x4xf32> to vector<8x1xf32>
    %15 = vector.broadcast %14 : vector<8x1xf32> to vector<8x256xf32>
    %16 = arith.mulf %15, %2 : vector<8x256xf32>
    %17 = arith.addf %13, %16 : vector<8x256xf32>
    %c0_7 = arith.constant 0 : index
    %c0_8 = arith.constant 0 : index
    %18 = vector.load %arg6[%c0_7, %c0_8] : memref<8x256xf32, #tpu.memory_space<vmem>>, vector<8x256xf32>
    tpu.vector_store %arg6[%c0_7, %c0_8], %17 {strides = array<i32>} : memref<8x256xf32, #tpu.memory_space<vmem>>, vector<8x256xf32>,
    return
  }
  func.func @transform_0(%arg0: i32, %arg1: i32) -> (i32, i32) {
    %c0_i32 = arith.constant 0 : i32
    %c0_i32_0 = arith.constant 0 : i32
    return %arg0, %c0_i32 : i32, i32
  }
  func.func @transform_1(%arg0: i32, %arg1: i32) -> (i32, i32) {
    %c0_i32 = arith.constant 0 : i32
    return %arg0, %arg1 : i32, i32
  }
  func.func @transform_2(%arg0: i32, %arg1: i32) -> (i32, i32) {
    %c0_i32 = arith.constant 0 : i32
    return %arg0, %arg1 : i32, i32
  }
  func.func @transform_3(%arg0: i32, %arg1: i32) -> (i32, i32) {
    %c0_i32 = arith.constant 0 : i32
    return %arg0, %arg1 : i32, i32
  }
  func.func @transform_4(%arg0: i32, %arg1: i32) -> (i32, i32) {
    %c0_i32 = arith.constant 0 : i32
    return %arg0, %arg1 : i32, i32
  }
}

</mosaic_0001>

<llo_original>
// kernel: tpu_custom_call.1
$region0: #{tpu_custom_call.1}
  #allocation0 [shape = 'u32[]', space=smem, size = 0x4, offset = 0x4, fixed_abs, tag = 'smem constant byte address 0x4 - core index']
  #allocation1 [shape = 'u32[144,128]{1,0:T(1,128)}', space=vmem, size = 0x12000, scoped, tag = 'internal scratch']
  %s0 = inlined_call_operand.vmem [shape: f32[8,4], index: 0, kind: input, shape index: {}]
  %s1 = inlined_call_operand.hbm [shape: f32[8,256], index: 1, kind: input, shape index: {}]
  %s2 = inlined_call_operand.vmem [shape: f32[8,256], index: 2, kind: input, shape index: {}]
  %s3 = inlined_call_operand.hbm [shape: f32[8,256], index: 3, kind: output, shape index: {0}]
  %s4 = inlined_call_operand.hbm [shape: f32[8,256], index: 4, kind: output, shape index: {1}]
  %5 = xla_tuple %s3, %s4
  %s6 = sld [smem:[#allocation0]]
  $region34: #{tpu_custom_call.1} parent=0
    _
  %s8 = ssub.s32 1, %s6
  %s9 = scalar_select 0, %s8, %s6
  $region1: #{tpu_custom_call.1} parent=0
    #allocation2 [shape = 'u8[8192]{0}', space=vmem, size = 0x2000, scoped, tag = 'input window, operand 1, single buffered']
    #allocation3 [shape = 's32[1]{0}', space=sflag, size = 0x4, scoped, tag = 'scoped memory for tpu_custom_call.1']
    #allocation4 [shape = 's32[1]{0}', space=sflag, size = 0x4, scoped, tag = 'scoped memory for tpu_custom_call.1']
    #allocation5 [shape = 'u8[8192]{0}', space=vmem, size = 0x2000, scoped, tag = 'output window, operand 0, single buffered']
    #allocation6 [shape = 'u8[8192]{0}', space=vmem, size = 0x2000, scoped, tag = 'output window, operand 1, single buffered']
    #allocation7 [shape = 's32[1]{0}', space=sflag, size = 0x4, scoped, tag = 'scoped memory for tpu_custom_call.1']
    %10 = vsyncpa [#allocation3], 0
    %11 = vsyncpa [#allocation4], 0
    %12 = vsyncpa [#allocation7], 0
    // Predicated region
    $region2: #{tpu_custom_call.1} parent=1 // pred_check
      _
    $region3: #{tpu_custom_call.1} parent=1 // pred_check_branch
      %14 = sbr.rel (0) target = $region5
    $region4: #{tpu_custom_call.1} parent=1 // pred_region
      _
    $region5: #{tpu_custom_call.1} parent=1 // pred_fallthru
      _
    // Predicated region
    $region6: #{tpu_custom_call.1} parent=1 // pred_check
      _
    $region7: #{tpu_custom_call.1} parent=1 // pred_check_branch
      %16 = sbr.rel (0) target = $region9
    $region8: #{tpu_custom_call.1} parent=1 // pred_region
      %s18 = ssub.s32 256, 256
      %19 = vsyncadd [#allocation3], %s18
      %s21 = sshll.u32 [#allocation2], 4
      %s22 = int_to_ptr.vmem [resolvable:$true] %s21
      %24 = dma.hbm_to_vmem [thread:$0]  %s1, 256, %s22, [#allocation3]
    $region9: #{tpu_custom_call.1} parent=1 // pred_fallthru
      _
    // Predicated region
    $region10: #{tpu_custom_call.1} parent=1 // pred_check
      _
    $region11: #{tpu_custom_call.1} parent=1 // pred_check_branch
      %26 = sbr.rel (0) target = $region13
    $region12: #{tpu_custom_call.1} parent=1 // pred_region
      _
    $region13: #{tpu_custom_call.1} parent=1 // pred_fallthru
      _
    // Predicated region
    $region14: #{tpu_custom_call.1} parent=1 // pred_check
      _
    $region15: #{tpu_custom_call.1} parent=1 // pred_check_branch
      %28 = sbr.rel (0) target = $region17
    $region16: #{tpu_custom_call.1} parent=1 // pred_region
      %29 = dma.done [#allocation3], 256
    $region17: #{tpu_custom_call.1} parent=1 // pred_fallthru
      _
    %v30 = vld [vmem:[%s0] sm:$0xff]
    %v31 = vld [vmem:[#allocation2] sm:$0xff]
    %v32 = vld [vmem:[#allocation2 + $0x8] sm:$0xff]
    %v33 = vld [vmem:[%s2] sm:$0xff]
    %v34 = vld [vmem:[%s2 + $0x8] sm:$0xff]
    %36 = vset.pattern.permute.xlu0 0
    %37 = vperm.xlu0 %36, %v30
    %v38 = vpop.permute.xlu0 %37
    %v40 = vmul.f32 %v38, %v31
    %v41 = vmul.f32 %v38, %v32
    %42 = vset.pattern.permute.xlu0 1
    %43 = vperm.xlu0 %42, %v30
    %v44 = vpop.permute.xlu0 %43
    %v46 = vmul.f32 %v44, %v33
    %v47 = vmul.f32 %v44, %v34
    %v48 = vadd.f32 %v40, %v46
    %v49 = vadd.f32 %v41, %v47
    %50 = vst [vmem:[#allocation5] sm:$0xff] %v48
    %51 = vst [vmem:[#allocation5 + $0x8] sm:$0xff] %v49
    %52 = vset.pattern.permute.xlu0 2
    %53 = vperm.xlu0 %52, %v30
    %v54 = vpop.permute.xlu0 %53
    %v56 = vmul.f32 %v54, %v31
    %v57 = vmul.f32 %v54, %v32
    %58 = vset.pattern.permute.xlu0 3
    %59 = vperm.xlu0 %58, %v30
    %v60 = vpop.permute.xlu0 %59
    %v62 = vmul.f32 %v60, %v33
    %v63 = vmul.f32 %v60, %v34
    %v64 = vadd.f32 %v56, %v62
    %v65 = vadd.f32 %v57, %v63
    %66 = vst [vmem:[#allocation6] sm:$0xff] %v64
    %67 = vst [vmem:[#allocation6 + $0x8] sm:$0xff] %v65
    // Predicated region
    $region18: #{tpu_custom_call.1} parent=1 // pred_check
      _
    $region19: #{tpu_custom_call.1} parent=1 // pred_check_branch
      %69 = sbr.rel (0) target = $region21
    $region20: #{tpu_custom_call.1} parent=1 // pred_region
      %s71 = ssub.s32 256, 256
      %72 = vsyncadd [#allocation4], %s71
      %s74 = sshll.u32 [#allocation5], 4
      %s75 = int_to_ptr.vmem [resolvable:$true] %s74
      %77 = dma.vmem_to_hbm [thread:$0]  %s75, 256, %s3, [#allocation4]
    $region21: #{tpu_custom_call.1} parent=1 // pred_fallthru
      _
    // Predicated region
    $region22: #{tpu_custom_call.1} parent=1 // pred_check
      _
    $region23: #{tpu_custom_call.1} parent=1 // pred_check_branch
      %79 = sbr.rel (0) target = $region25
    $region24: #{tpu_custom_call.1} parent=1 // pred_region
      %s81 = ssub.s32 256, 256
      %82 = vsyncadd [#allocation7], %s81
      %s84 = sshll.u32 [#allocation6], 4
      %s85 = int_to_ptr.vmem [resolvable:$true] %s84
      %87 = dma.vmem_to_hbm [thread:$0]  %s85, 256, %s4, [#allocation7]
    $region25: #{tpu_custom_call.1} parent=1 // pred_fallthru
      _
    // Predicated region
    $region26: #{tpu_custom_call.1} parent=1 // pred_check
      _
    $region27: #{tpu_custom_call.1} parent=1 // pred_check_branch
      %89 = sbr.rel (0) target = $region29
    $region28: #{tpu_custom_call.1} parent=1 // pred_region
      %90 = dma.done [#allocation4], 256
    $region29: #{tpu_custom_call.1} parent=1 // pred_fallthru
      _
    // Predicated region
    $region30: #{tpu_custom_call.1} parent=1 // pred_check
      _
    $region31: #{tpu_custom_call.1} parent=1 // pred_check_branch
      %92 = sbr.rel (0) target = $region33
    $region32: #{tpu_custom_call.1} parent=1 // pred_region
      %93 = dma.done [#allocation7], 256
    $region33: #{tpu_custom_call.1} parent=1 // pred_fallthru
      _
    %94 = vsyncpa [#allocation3], 1
    %95 = vsyncpa [#allocation4], 1
    %96 = vsyncpa [#allocation7], 1

</llo_original>
